<compile_context>
chip_gen: v6e
topology: v6e:2x2x1
jax: 0.10.0
libtpu: 0.0.40
codegen_flags: <defaults>
</compile_context>

<pallas_src>
import functools

import jax
import jax.numpy as jnp
from jax.experimental import pallas as pl
from jax.experimental.pallas import tpu as pltpu

LOG_STD_MAX = 2.0
LOG_STD_MIN = -20.0
NEG_SLOPE = 0.01  # nn.LeakyReLU default negative_slope


def _leaky_relu(x):
    return jnp.where(x >= 0, x, NEG_SLOPE * x)


def bwe_agent_kernel(state_ref, w1_ref, w2_ref, w3_ref, b_ref, action_ref, *,
                     max_action, out_pad):
    x = state_ref[...]                                                   # (TB, S)

    h = jnp.dot(x, w1_ref[...], preferred_element_type=jnp.float32)     # (TB, 256)
    h = _leaky_relu(h + b_ref[0:1, :])

    h = jnp.dot(h, w2_ref[...], preferred_element_type=jnp.float32)     # (TB, 256)
    h = _leaky_relu(h + b_ref[1:2, :])

    # lane-dense final layer: w3 is zero-padded to (256, out_pad)
    h = jnp.dot(h, w3_ref[...], preferred_element_type=jnp.float32)     # (TB, out_pad)
    h = _leaky_relu(h + b_ref[2:3, :out_pad])

    action_ref[...] = jnp.tanh(h) * (max_action * 1000000.0)


def bwe_agent_forward(state, params, *, max_action):
    B, state_dim = state.shape
    hidden = params["w1"].shape[1]
    action_dim = params["w3"].shape[1]

    # --- lane-dense padding of the last layer (action_dim -> multiple of 128)
    out_pad = max(128, ((action_dim + 127) // 128) * 128)
    w3p = jnp.zeros((hidden, out_pad), jnp.float32).at[:, :action_dim].set(params["w3"])
    b3p = jnp.zeros((1, hidden), jnp.float32).at[:, :action_dim].set(params["b3"])
    biases = jnp.concatenate([params["b1"], params["b2"], b3p], axis=0)  # (3, hidden)

    # --- batch tile (multiple of 8 sublanes); pad batch to a whole number of tiles
    if B >= 256:
        tb = 256
    else:
        tb = ((B + 7) // 8) * 8
    b_pad = ((B + tb - 1) // tb) * tb
    state_p = state if b_pad == B else jnp.pad(state, ((0, b_pad - B), (0, 0)))
    grid = (b_pad // tb,)

    kernel = functools.partial(bwe_agent_kernel, max_action=max_action, out_pad=out_pad)

    action_p = pl.pallas_call(
        kernel,
        out_shape=jax.ShapeDtypeStruct((b_pad, out_pad), jnp.float32),
        grid=grid,
        in_specs=[
            pl.BlockSpec((tb, state_dim), lambda i: (i, 0)),      # state tile
            pl.BlockSpec((state_dim, hidden), lambda i: (0, 0)),  # w1 (resident)
            pl.BlockSpec((hidden, hidden), lambda i: (0, 0)),     # w2 (resident)
            pl.BlockSpec((hidden, out_pad), lambda i: (0, 0)),    # w3 padded (resident)
            pl.BlockSpec((3, hidden), lambda i: (0, 0)),          # packed biases
        ],
        out_specs=pl.BlockSpec((tb, out_pad), lambda i: (i, 0)),
        compiler_params=pltpu.CompilerParams(
            dimension_semantics=("parallel",)),
    )(state_p, params["w1"], params["w2"], w3p, biases)

    action = action_p[:B, :action_dim]

    # std is independent of state: compute once in the wrapper (hoisted out of
    # the kernel), then broadcast to (B, 1) to match the PyTorch API.
    std = jnp.exp(jnp.clip(params["log_std"], LOG_STD_MIN, LOG_STD_MAX))
    std = jnp.broadcast_to(std.reshape(1, -1)[:, :1], (B, 1))
    return action, std


def init_params(key, state_dim, action_dim, hidden=256):
    # Deterministic init mimicking nn.Linear: U(-1/sqrt(fan_in), 1/sqrt(fan_in)).
    ks = jax.random.split(key, 6)

    def linear(kw, kb, fan_in, fan_out):
        bound = 1.0 / jnp.sqrt(jnp.float32(fan_in))
        w = jax.random.uniform(kw, (fan_in, fan_out), jnp.float32, -bound, bound)
        b = jax.random.uniform(kb, (1, fan_out), jnp.float32, -bound, bound)
        return w, b

    w1, b1 = linear(ks[0], ks[1], state_dim, hidden)
    w2, b2 = linear(ks[2], ks[3], hidden, hidden)
    w3, b3 = linear(ks[4], ks[5], hidden, action_dim)
    log_std = jnp.zeros((1, action_dim), jnp.float32)  # nn.Parameter(torch.zeros(action_dim))
    return dict(w1=w1, b1=b1, w2=w2, b2=b2, w3=w3, b3=b3, log_std=log_std)


if __name__ == "__main__":
    key = jax.random.PRNGKey(0)
    k_state, k_params = jax.random.split(key)

    batch = 8
    state_dim = 32
    action_dim = 1          # std.expand(B, 1) implies action_dim == 1
    max_action = 1.0

    state = jax.random.normal(k_state, (batch, state_dim), jnp.float32)
    params = init_params(k_params, state_dim, action_dim)

    action, std = bwe_agent_forward(state, params, max_action=max_action)
    jax.block_until_ready((action, std))

    # Pure-JAX reference check.
    def ref(state, p):
        h = jnp.dot(state, p["w1"]) + p["b1"]
        h = jnp.where(h >= 0, h, NEG_SLOPE * h)
        h = jnp.dot(h, p["w2"]) + p["b2"]
        h = jnp.where(h >= 0, h, NEG_SLOPE * h)
        h = jnp.dot(h, p["w3"]) + p["b3"]
        h = jnp.where(h >= 0, h, NEG_SLOPE * h)
        act = jnp.tanh(h) * (max_action * 1000000.0)
        s = jnp.exp(jnp.clip(p["log_std"], LOG_STD_MIN, LOG_STD_MAX))
        return act, jnp.broadcast_to(s, (state.shape[0], 1))

    ref_action, ref_std = ref(state, params)
    assert action.shape == (batch, action_dim) and std.shape == (batch, 1)
    assert jnp.allclose(action, ref_action, rtol=1e-4, atol=1e-2), "action mismatch"
    assert jnp.allclose(std, ref_std, rtol=1e-5, atol=1e-6), "std mismatch"

    print("KERNEL_OK")
</pallas_src>

<mosaic_0001>
module attributes {stable_mosaic.version = 11 : i64} {
  func.func @bwe_agent_kernel(%arg0: i32, %arg1: memref<8x32xf32, #tpu.memory_space<vmem>>, %arg2: memref<32x256xf32, #tpu.memory_space<vmem>>, %arg3: memref<256x256xf32, #tpu.memory_space<vmem>>, %arg4: memref<256x128xf32, #tpu.memory_space<vmem>>, %arg5: memref<3x256xf32, #tpu.memory_space<vmem>>, %arg6: memref<8x128xf32, #tpu.memory_space<vmem>>) attributes {dimension_semantics = [#tpu.dimension_semantics<parallel>], iteration_bounds = array<i64: 1>, scalar_prefetch = 0 : i64, scratch_operands = 0 : i64, tpu.core_type = #tpu.core_type<tc>, window_params = [{transform_indices = @transform_0, window_bounds = array<i64: 8, 32>}, {pipeline_mode = #tpu.pipeline_mode<synchronous>, transform_indices = @transform_1, window_bounds = array<i64: 32, 256>}, {pipeline_mode = #tpu.pipeline_mode<synchronous>, transform_indices = @transform_2, window_bounds = array<i64: 256, 256>}, {pipeline_mode = #tpu.pipeline_mode<synchronous>, transform_indices = @transform_3, window_bounds = array<i64: 256, 128>}, {pipeline_mode = #tpu.pipeline_mode<synchronous>, transform_indices = @transform_4, window_bounds = array<i64: 3, 256>}, {transform_indices = @transform_5, window_bounds = array<i64: 8, 128>}]} {
    %c0 = arith.constant 0 : index
    %c0_0 = arith.constant 0 : index
    %0 = vector.load %arg1[%c0, %c0_0] : memref<8x32xf32, #tpu.memory_space<vmem>>, vector<8x32xf32>
    %c0_1 = arith.constant 0 : index
    %c0_2 = arith.constant 0 : index
    %1 = vector.load %arg2[%c0_1, %c0_2] : memref<32x256xf32, #tpu.memory_space<vmem>>, vector<32x256xf32>
    %cst = arith.constant dense<0.000000e+00> : vector<8x256xf32>
    %2 = tpu.matmul %0, %1, %cst {dimension_numbers = #tpu.dot_dimension_numbers<[1], [0], [0], [1], [0, 0, 1, 1], [], []>} : vector<8x32xf32>, vector<32x256xf32>, vector<8x256xf32> -> vector<8x256xf32>
    %c0_3 = arith.constant 0 : index
    %c0_4 = arith.constant 0 : index
    %3 = vector.load %arg5[%c0_3, %c0_4] : memref<3x256xf32, #tpu.memory_space<vmem>>, vector<1x256xf32>
    %4 = vector.broadcast %3 : vector<1x256xf32> to vector<8x256xf32>
    %5 = arith.addf %2, %4 : vector<8x256xf32>
    %cst_5 = arith.constant 0.000000e+00 : f32
    %6 = vector.broadcast %cst_5 : f32 to vector<8x256xf32>
    %7 = arith.cmpf oge, %5, %6 : vector<8x256xf32>
    %cst_6 = arith.constant 0.00999999977 : f32
    %8 = vector.broadcast %cst_6 : f32 to vector<8x256xf32>
    %9 = arith.mulf %8, %5 : vector<8x256xf32>
    %10 = arith.select %7, %5, %9 : vector<8x256xi1>, vector<8x256xf32>
    %c0_7 = arith.constant 0 : index
    %c0_8 = arith.constant 0 : index
    %11 = vector.load %arg3[%c0_7, %c0_8] : memref<256x256xf32, #tpu.memory_space<vmem>>, vector<256x256xf32>
    %cst_9 = arith.constant dense<0.000000e+00> : vector<8x256xf32>
    %12 = tpu.matmul %10, %11, %cst_9 {dimension_numbers = #tpu.dot_dimension_numbers<[1], [0], [0], [1], [0, 0, 1, 1], [], []>} : vector<8x256xf32>, vector<256x256xf32>, vector<8x256xf32> -> vector<8x256xf32>
    %c1 = arith.constant 1 : index
    %c0_10 = arith.constant 0 : index
    %13 = vector.load %arg5[%c1, %c0_10] : memref<3x256xf32, #tpu.memory_space<vmem>>, vector<1x256xf32>
    %14 = vector.broadcast %13 : vector<1x256xf32> to vector<8x256xf32>
    %15 = arith.addf %12, %14 : vector<8x256xf32>
    %cst_11 = arith.constant 0.000000e+00 : f32
    %16 = vector.broadcast %cst_11 : f32 to vector<8x256xf32>
    %17 = arith.cmpf oge, %15, %16 : vector<8x256xf32>
    %cst_12 = arith.constant 0.00999999977 : f32
    %18 = vector.broadcast %cst_12 : f32 to vector<8x256xf32>
    %19 = arith.mulf %18, %15 : vector<8x256xf32>
    %20 = arith.select %17, %15, %19 : vector<8x256xi1>, vector<8x256xf32>
    %c0_13 = arith.constant 0 : index
    %c0_14 = arith.constant 0 : index
    %21 = vector.load %arg4[%c0_13, %c0_14] : memref<256x128xf32, #tpu.memory_space<vmem>>, vector<256x128xf32>
    %cst_15 = arith.constant dense<0.000000e+00> : vector<8x128xf32>
    %22 = tpu.matmul %20, %21, %cst_15 {dimension_numbers = #tpu.dot_dimension_numbers<[1], [0], [0], [1], [0, 0, 1, 1], [], []>} : vector<8x256xf32>, vector<256x128xf32>, vector<8x128xf32> -> vector<8x128xf32>
    %c2 = arith.constant 2 : index
    %c0_16 = arith.constant 0 : index
    %23 = vector.load %arg5[%c2, %c0_16] : memref<3x256xf32, #tpu.memory_space<vmem>>, vector<1x128xf32>
    %24 = vector.broadcast %23 : vector<1x128xf32> to vector<8x128xf32>
    %25 = arith.addf %22, %24 : vector<8x128xf32>
    %cst_17 = arith.constant 0.000000e+00 : f32
    %26 = vector.broadcast %cst_17 : f32 to vector<8x128xf32>
    %27 = arith.cmpf oge, %25, %26 : vector<8x128xf32>
    %cst_18 = arith.constant 0.00999999977 : f32
    %28 = vector.broadcast %cst_18 : f32 to vector<8x128xf32>
    %29 = arith.mulf %28, %25 : vector<8x128xf32>
    %30 = arith.select %27, %25, %29 : vector<8x128xi1>, vector<8x128xf32>
    %31 = math.tanh %30 : vector<8x128xf32>
    %cst_19 = arith.constant 1.000000e+06 : f32
    %32 = vector.broadcast %cst_19 : f32 to vector<8x128xf32>
    %33 = arith.mulf %31, %32 : vector<8x128xf32>
    %c0_20 = arith.constant 0 : index
    %c0_21 = arith.constant 0 : index
    %34 = vector.load %arg6[%c0_20, %c0_21] : memref<8x128xf32, #tpu.memory_space<vmem>>, vector<8x128xf32>
    tpu.vector_store %arg6[%c0_20, %c0_21], %33 {strides = array<i32>} : memref<8x128xf32, #tpu.memory_space<vmem>>, vector<8x128xf32>,
    return
  }
  func.func @transform_0(%arg0: i32) -> (i32, i32) {
    %c0_i32 = arith.constant 0 : i32
    %c0_i32_0 = arith.constant 0 : i32
    return %arg0, %c0_i32 : i32, i32
  }
  func.func @transform_1(%arg0: i32) -> (i32, i32) {
    %c0_i32 = arith.constant 0 : i32
    %c0_i32_0 = arith.constant 0 : i32
    %c0_i32_1 = arith.constant 0 : i32
    return %c0_i32, %c0_i32_0 : i32, i32
  }
  func.func @transform_2(%arg0: i32) -> (i32, i32) {
    %c0_i32 = arith.constant 0 : i32
    %c0_i32_0 = arith.constant 0 : i32
    %c0_i32_1 = arith.constant 0 : i32
    return %c0_i32, %c0_i32_0 : i32, i32
  }
  func.func @transform_3(%arg0: i32) -> (i32, i32) {
    %c0_i32 = arith.constant 0 : i32
    %c0_i32_0 = arith.constant 0 : i32
    %c0_i32_1 = arith.constant 0 : i32
    return %c0_i32, %c0_i32_0 : i32, i32
  }
  func.func @transform_4(%arg0: i32) -> (i32, i32) {
    %c0_i32 = arith.constant 0 : i32
    %c0_i32_0 = arith.constant 0 : i32
    %c0_i32_1 = arith.constant 0 : i32
    return %c0_i32, %c0_i32_0 : i32, i32
  }
  func.func @transform_5(%arg0: i32) -> (i32, i32) {
    %c0_i32 = arith.constant 0 : i32
    %c0_i32_0 = arith.constant 0 : i32
    return %arg0, %c0_i32 : i32, i32
  }
}

</mosaic_0001>

<llo_original>
// kernel: tpu_custom_call.1
$region0: #{tpu_custom_call.1}
  #allocation0 [shape = 'u32[]', space=smem, size = 0x4, offset = 0x4, fixed_abs, tag = 'smem constant byte address 0x4 - core index']
  #allocation1 [shape = 'u32[144,128]{1,0:T(1,128)}', space=vmem, size = 0x12000, scoped, tag = 'internal scratch']
  %s0 = inlined_call_operand.hbm [shape: f32[8,32], index: 0, kind: input, shape index: {}]
  %s1 = inlined_call_operand.hbm [shape: f32[32,256], index: 1, kind: input, shape index: {}]
  %s2 = inlined_call_operand.hbm [shape: f32[256,256], index: 2, kind: input, shape index: {}]
  %s3 = inlined_call_operand.hbm [shape: f32[256,128], index: 3, kind: input, shape index: {}]
  %s4 = inlined_call_operand.hbm [shape: f32[3,256], index: 4, kind: input, shape index: {}]
  %s5 = inlined_call_operand.hbm [shape: f32[8,128], index: 5, kind: output, shape index: {}]
  %s6 = sld [smem:[#allocation0]]
  $region50: #{tpu_custom_call.1} parent=0
    _
  %s8 = ssub.s32 1, %s6
  %s9 = scalar_select 0, %s8, %s6
  $region1: #{tpu_custom_call.1} parent=0
    #allocation2 [shape = 'u8[4096]{0}', space=vmem, size = 0x1000, scoped, tag = 'input window, operand 0, single buffered']
    #allocation3 [shape = 's32[1]{0}', space=sflag, size = 0x4, scoped, tag = 'scoped memory for tpu_custom_call.1']
    #allocation4 [shape = 's32[1]{0}', space=sflag, size = 0x4, scoped, tag = 'scoped memory for tpu_custom_call.1']
    #allocation5 [shape = 'u8[32768]{0}', space=vmem, size = 0x8000, scoped, tag = 'input window, operand 1, single buffered']
    #allocation6 [shape = 's32[1]{0}', space=sflag, size = 0x4, scoped, tag = 'scoped memory for tpu_custom_call.1']
    #allocation7 [shape = 'u8[262144]{0}', space=vmem, size = 0x40000, scoped, tag = 'input window, operand 2, single buffered']
    #allocation8 [shape = 'u8[131072]{0}', space=vmem, size = 0x20000, scoped, tag = 'input window, operand 3, single buffered']
    #allocation9 [shape = 's32[1]{0}', space=sflag, size = 0x4, scoped, tag = 'scoped memory for tpu_custom_call.1']
    #allocation10 [shape = 'u8[4096]{0}', space=vmem, size = 0x1000, scoped, tag = 'input window, operand 4, single buffered']
    #allocation11 [shape = 'u8[4096]{0}', space=vmem, size = 0x1000, scoped, tag = 'output window, operand 0, single buffered']
    %10 = vsyncpa [#allocation3], 0
    %11 = vsyncpa [#allocation6], 0
    %12 = vsyncpa [#allocation9], 0
    %13 = vsyncpa [#allocation4], 0
    // Predicated region
    $region2: #{tpu_custom_call.1} parent=1 // pred_check
      _
    $region3: #{tpu_custom_call.1} parent=1 // pred_check_branch
      %15 = sbr.rel (0) target = $region5
    $region4: #{tpu_custom_call.1} parent=1 // pred_region
      %s17 = ssub.s32 128, 128
      %18 = vsyncadd [#allocation3], %s17
      %s20 = sshll.u32 [#allocation2], 4
      %s21 = int_to_ptr.vmem [resolvable:$true] %s20
      %23 = dma.hbm_to_vmem [thread:$0]  %s0, 128, %s21, [#allocation3]
    $region5: #{tpu_custom_call.1} parent=1 // pred_fallthru
      _
    // Predicated region
    $region6: #{tpu_custom_call.1} parent=1 // pred_check
      _
    $region7: #{tpu_custom_call.1} parent=1 // pred_check_branch
      %25 = sbr.rel (0) target = $region9
    $region8: #{tpu_custom_call.1} parent=1 // pred_region
      %s27 = ssub.s32 1024, 1024
      %28 = vsyncadd [#allocation6], %s27
      %s29 = sshll.u32 [#allocation5], 4
      %s30 = int_to_ptr.vmem [resolvable:$true] %s29
      %35 = dma.hbm_to_vmem [thread:$0]  %s1, 1024, %s30, [#allocation6], 256, 256, 16
    $region9: #{tpu_custom_call.1} parent=1 // pred_fallthru
      _
    // Predicated region
    $region10: #{tpu_custom_call.1} parent=1 // pred_check
      _
    $region11: #{tpu_custom_call.1} parent=1 // pred_check_branch
      %37 = sbr.rel (0) target = $region13
    $region12: #{tpu_custom_call.1} parent=1 // pred_region
      %s39 = ssub.s32 8192, 8192
      %40 = vsyncadd [#allocation6], %s39
      %s41 = sshll.u32 [#allocation7], 4
      %s42 = int_to_ptr.vmem [resolvable:$true] %s41
      %47 = dma.hbm_to_vmem [thread:$0]  %s2, 8192, %s42, [#allocation6], 256, 256, 16
    $region13: #{tpu_custom_call.1} parent=1 // pred_fallthru
      _
    // Predicated region
    $region14: #{tpu_custom_call.1} parent=1 // pred_check
      _
    $region15: #{tpu_custom_call.1} parent=1 // pred_check_branch
      %49 = sbr.rel (0) target = $region17
    $region16: #{tpu_custom_call.1} parent=1 // pred_region
      %s51 = ssub.s32 4096, 4096
      %52 = vsyncadd [#allocation9], %s51
      %s53 = sshll.u32 [#allocation8], 4
      %s54 = int_to_ptr.vmem [resolvable:$true] %s53
      %59 = dma.hbm_to_vmem [thread:$0]  %s3, 4096, %s54, [#allocation9], 128, 128, 8
    $region17: #{tpu_custom_call.1} parent=1 // pred_fallthru
      _
    // Predicated region
    $region18: #{tpu_custom_call.1} parent=1 // pred_check
      _
    $region19: #{tpu_custom_call.1} parent=1 // pred_check_branch
      %61 = sbr.rel (0) target = $region21
    $region20: #{tpu_custom_call.1} parent=1 // pred_region
      %s63 = ssub.s32 128, 128
      %64 = vsyncadd [#allocation9], %s63
      %s66 = sshll.u32 [#allocation10], 4
      %s67 = int_to_ptr.vmem [resolvable:$true] %s66
      %69 = dma.hbm_to_vmem [thread:$0]  %s4, 128, %s67, [#allocation9]
    $region21: #{tpu_custom_call.1} parent=1 // pred_fallthru
      _
    // Predicated region
    $region22: #{tpu_custom_call.1} parent=1 // pred_check
      _
    $region23: #{tpu_custom_call.1} parent=1 // pred_check_branch
      %71 = sbr.rel (0) target = $region25
    $region24: #{tpu_custom_call.1} parent=1 // pred_region
      %72 = dma.done [#allocation3], 128
    $region25: #{tpu_custom_call.1} parent=1 // pred_fallthru
      _
    // Predicated region
    $region26: #{tpu_custom_call.1} parent=1 // pred_check
      _
    $region27: #{tpu_custom_call.1} parent=1 // pred_check_branch
      %74 = sbr.rel (0) target = $region29
    $region28: #{tpu_custom_call.1} parent=1 // pred_region
      %75 = dma.done [#allocation6], 1024
    $region29: #{tpu_custom_call.1} parent=1 // pred_fallthru
      _
    // Predicated region
    $region30: #{tpu_custom_call.1} parent=1 // pred_check
      _
    $region31: #{tpu_custom_call.1} parent=1 // pred_check_branch
      %77 = sbr.rel (0) target = $region33
    $region32: #{tpu_custom_call.1} parent=1 // pred_region
      %78 = dma.done [#allocation6], 8192
    $region33: #{tpu_custom_call.1} parent=1 // pred_fallthru
      _
    // Predicated region
    $region34: #{tpu_custom_call.1} parent=1 // pred_check
      _
    $region35: #{tpu_custom_call.1} parent=1 // pred_check_branch
      %80 = sbr.rel (0) target = $region37
    $region36: #{tpu_custom_call.1} parent=1 // pred_region
      %81 = dma.done [#allocation9], 4096
    $region37: #{tpu_custom_call.1} parent=1 // pred_fallthru
      _
    // Predicated region
    $region38: #{tpu_custom_call.1} parent=1 // pred_check
      _
    $region39: #{tpu_custom_call.1} parent=1 // pred_check_branch
      %83 = sbr.rel (0) target = $region41
    $region40: #{tpu_custom_call.1} parent=1 // pred_region
      %84 = dma.done [#allocation9], 128
    $region41: #{tpu_custom_call.1} parent=1 // pred_fallthru
      _
    %v85 = vld [vmem:[#allocation2] sm:$0xff]
    %v86 = vld [vmem:[#allocation5] sm:$0xff]
    %v87 = vld [vmem:[#allocation5 + $0x8] sm:$0xff]
    %v88 = vld [vmem:[#allocation5 + $0x10] sm:$0xff]
    %v89 = vld [vmem:[#allocation5 + $0x18] sm:$0xff]
    %v90 = vld [vmem:[#allocation5 + $0x20] sm:$0xff]
    %v91 = vld [vmem:[#allocation5 + $0x28] sm:$0xff]
    %v92 = vld [vmem:[#allocation5 + $0x30] sm:$0xff]
    %v93 = vld [vmem:[#allocation5 + $0x38] sm:$0xff]
    %v94 = vld [vmem:[#allocation10] ss:$4 sm:$0x3]
    %v96 = vlaneseq
    %v97 = vshrl.u32 %v96, 7
    %v98 = vsub.s32 0, %v97
    %v99 = vrot.slane %v94, %v98
    %v100 = vlaneseq
    %v101 = vshrl.u32 %v100, 7
    %v102 = vsub.s32 1, %v101
    %v103 = vrot.slane %v94, %v102
    %vm106 = vcmask 261120
    %v108 = vsel %vm106, %v85, 0
    %110 = vmatprep.subr.mxu0 0.0
    %111 = vmatpush1.msra.mxu0 0.0
    %112 = vmatprep.subr.mxu0 0.0
    %113 = vmatpush1.msra.mxu0 0.0
    %114 = vmatprep.subr.mxu0 0.0
    %115 = vmatpush1.msra.mxu0 0.0
    %116 = vmatprep.subr.mxu0 0.0
    %117 = vmatpush1.msra.mxu0 0.0
    %118 = vmatprep.subr.mxu0 0.0
    %119 = vmatpush1.msra.mxu0 0.0
    %120 = vmatprep.subr.mxu0 0.0
    %121 = vmatpush1.msra.mxu0 0.0
    %122 = vmatprep.subr.mxu0 0.0
    %123 = vmatpush1.msra.mxu0 0.0
    %124 = vmatprep.subr.mxu0 0.0
    %125 = vmatpush1.msra.mxu0 0.0
    %126 = vmatprep.subr.mxu0 0.0
    %127 = vmatpush1.msra.mxu0 0.0
    %128 = vmatprep.subr.mxu0 0.0
    %129 = vmatpush1.msra.mxu0 0.0
    %130 = vmatprep.subr.mxu0 0.0
    %131 = vmatpush1.msra.mxu0 0.0
    %132 = vmatprep.subr.mxu0 0.0
    %133 = vmatpush1.msra.mxu0 0.0
    %134 = vmatprep.subr.mxu0 %v93
    %135 = vmatpush1.msra.mxu0 %v92
    %136 = vmatprep.subr.mxu0 %v91
    %137 = vmatpush1.msra.mxu0 %v90
    %138 = vmatprep.subr.mxu0 %v89
    %139 = vmatpush1.msra.mxu0 %v88
    %140 = vmatprep.subr.mxu0 %v87
    %141 = vmatpush1.msra.mxu0 %v86
    %142 = vmatprep.subr.mxu0 0.0
    %143 = vmatpush2.msra.mxu0 0.0
    %144 = vmatprep.subr.mxu0 0.0
    %145 = vmatpush2.msra.mxu0 0.0
    %146 = vmatprep.subr.mxu0 0.0
    %147 = vmatpush2.msra.mxu0 0.0
    %148 = vmatprep.subr.mxu0 0.0
    %149 = vmatpush2.msra.mxu0 0.0
    %150 = vmatprep.subr.mxu0 0.0
    %151 = vmatpush2.msra.mxu0 0.0
    %152 = vmatprep.subr.mxu0 0.0
    %153 = vmatpush2.msra.mxu0 0.0
    %154 = vmatprep.subr.mxu0 0.0
    %155 = vmatpush2.msra.mxu0 0.0
    %156 = vmatprep.subr.mxu0 0.0
    %157 = vmatpush2.msra.mxu0 0.0
    %158 = vmatprep.subr.mxu0 0.0
    %159 = vmatpush2.msra.mxu0 0.0
    %160 = vmatprep.subr.mxu0 0.0
    %161 = vmatpush2.msra.mxu0 0.0
    %162 = vmatprep.subr.mxu0 0.0
    %163 = vmatpush2.msra.mxu0 0.0
    %164 = vmatprep.subr.mxu0 0.0
    %165 = vmatpush2.msra.mxu0 0.0
    %166 = vmatprep.subr.mxu0 0.0
    %167 = vmatpush2.msra.mxu0 0.0
    %168 = vmatprep.subr.mxu0 0.0
    %169 = vmatpush2.msra.mxu0 0.0
    %170 = vmatprep.subr.mxu0 0.0
    %171 = vmatpush2.msra.mxu0 0.0
    %172 = vmatprep.subr.mxu0 0.0
    %173 = vmatpush2.msra.mxu0 0.0
    %174 = vmatprep.mubr.f32.mxu0 0.0
    %175 = vmatmul.mubr.f32.gmra.mxu0 %v108
    %v176 = vpop.f32.mrf.mxu0
    %v177 = vadd.f32 %v99, %v176
    %v178 = vpop.f32.mrf.mxu0
    %v179 = vadd.f32 %v103, %v178
    %180 = vdwg.mxu0
    %vm181 = vcmp.ge.f32.partialorder %v177, 0.0
    %vm182 = vcmp.ge.f32.partialorder %v179, 0.0
    %v183 = vmul.f32 %v177, 0.01
    %v184 = vmul.f32 %v179, 0.01
    %v185 = vsel %vm181, %v177, %v183
    %v186 = vsel %vm182, %v179, %v184
    %v187 = vld [vmem:[#allocation7] sm:$0xff]
    %v188 = vld [vmem:[#allocation7 + $0x8] sm:$0xff]
    %v189 = vld [vmem:[#allocation7 + $0x10] sm:$0xff]
    %v190 = vld [vmem:[#allocation7 + $0x18] sm:$0xff]
    %v191 = vld [vmem:[#allocation7 + $0x20] sm:$0xff]
    %v192 = vld [vmem:[#allocation7 + $0x28] sm:$0xff]
    %v193 = vld [vmem:[#allocation7 + $0x30] sm:$0xff]
    %v194 = vld [vmem:[#allocation7 + $0x38] sm:$0xff]
    %v195 = vld [vmem:[#allocation7 + $0x40] sm:$0xff]
    %v196 = vld [vmem:[#allocation7 + $0x48] sm:$0xff]
    %v197 = vld [vmem:[#allocation7 + $0x50] sm:$0xff]
    %v198 = vld [vmem:[#allocation7 + $0x58] sm:$0xff]
    %v199 = vld [vmem:[#allocation7 + $0x60] sm:$0xff]
    %v200 = vld [vmem:[#allocation7 + $0x68] sm:$0xff]
    %v201 = vld [vmem:[#allocation7 + $0x70] sm:$0xff]
    %v202 = vld [vmem:[#allocation7 + $0x78] sm:$0xff]
    %v203 = vld [vmem:[#allocation7 + $0x80] sm:$0xff]
    %v204 = vld [vmem:[#allocation7 + $0x88] sm:$0xff]
    %v205 = vld [vmem:[#allocation7 + $0x90] sm:$0xff]
    %v206 = vld [vmem:[#allocation7 + $0x98] sm:$0xff]
    %v207 = vld [vmem:[#allocation7 + $0xa0] sm:$0xff]
    %v208 = vld [vmem:[#allocation7 + $0xa8] sm:$0xff]
    %v209 = vld [vmem:[#allocation7 + $0xb0] sm:$0xff]
    %v210 = vld [vmem:[#allocation7 + $0xb8] sm:$0xff]
    %v211 = vld [vmem:[#allocation7 + $0xc0] sm:$0xff]
    %v212 = vld [vmem:[#allocation7 + $0xc8] sm:$0xff]
    %v213 = vld [vmem:[#allocation7 + $0xd0] sm:$0xff]
    %v214 = vld [vmem:[#allocation7 + $0xd8] sm:$0xff]
    %v215 = vld [vmem:[#allocation7 + $0xe0] sm:$0xff]
    %v216 = vld [vmem:[#allocation7 + $0xe8] sm:$0xff]
    %v217 = vld [vmem:[#allocation7 + $0xf0] sm:$0xff]
    %v218 = vld [vmem:[#allocation7 + $0xf8] sm:$0xff]
    %v219 = vld [vmem:[#allocation7 + $0x100] sm:$0xff]
    %v220 = vld [vmem:[#allocation7 + $0x108] sm:$0xff]
    %v221 = vld [vmem:[#allocation7 + $0x110] sm:$0xff]
    %v222 = vld [vmem:[#allocation7 + $0x118] sm:$0xff]
    %v223 = vld [vmem:[#allocation7 + $0x120] sm:$0xff]
    %v224 = vld [vmem:[#allocation7 + $0x128] sm:$0xff]
    %v225 = vld [vmem:[#allocation7 + $0x130] sm:$0xff]
    %v226 = vld [vmem:[#allocation7 + $0x138] sm:$0xff]
    %v227 = vld [vmem:[#allocation7 + $0x140] sm:$0xff]
    %v228 = vld [vmem:[#allocation7 + $0x148] sm:$0xff]
    %v229 = vld [vmem:[#allocation7 + $0x150] sm:$0xff]
    %v230 = vld [vmem:[#allocation7 + $0x158] sm:$0xff]
    %v231 = vld [vmem:[#allocation7 + $0x160] sm:$0xff]
    %v232 = vld [vmem:[#allocation7 + $0x168] sm:$0xff]
    %v233 = vld [vmem:[#allocation7 + $0x170] sm:$0xff]
    %v234 = vld [vmem:[#allocation7 + $0x178] sm:$0xff]
    %v235 = vld [vmem:[#allocation7 + $0x180] sm:$0xff]
    %v236 = vld [vmem:[#allocation7 + $0x188] sm:$0xff]
    %v237 = vld [vmem:[#allocation7 + $0x190] sm:$0xff]
    %v238 = vld [vmem:[#allocation7 + $0x198] sm:$0xff]
    %v239 = vld [vmem:[#allocation7 + $0x1a0] sm:$0xff]
    %v240 = vld [vmem:[#allocation7 + $0x1a8] sm:$0xff]
    %v241 = vld [vmem:[#allocation7 + $0x1b0] sm:$0xff]
    %v242 = vld [vmem:[#allocation7 + $0x1b8] sm:$0xff]
    %v243 = vld [vmem:[#allocation7 + $0x1c0] sm:$0xff]
    %v244 = vld [vmem:[#allocation7 + $0x1c8] sm:$0xff]
    %v245 = vld [vmem:[#allocation7 + $0x1d0] sm:$0xff]
    %v246 = vld [vmem:[#allocation7 + $0x1d8] sm:$0xff]
    %v247 = vld [vmem:[#allocation7 + $0x1e0] sm:$0xff]
    %v248 = vld [vmem:[#allocation7 + $0x1e8] sm:$0xff]
    %v249 = vld [vmem:[#allocation7 + $0x1f0] sm:$0xff]
    %v250 = vld [vmem:[#allocation7 + $0x1f8] sm:$0xff]
    %s251 = scalar_lea.vmem [#allocation10], 1
    %v252 = vld [vmem:[%s251] ss:$4 sm:$0x3]
    %v254 = vlaneseq
    %v255 = vshrl.u32 %v254, 7
    %v256 = vsub.s32 0, %v255
    %v257 = vrot.slane %v252, %v256
    %v258 = vlaneseq
    %v259 = vshrl.u32 %v258, 7
    %v260 = vsub.s32 1, %v259
    %v261 = vrot.slane %v252, %v260
    %264 = vmatprep.subr.mxu0 %v218
    %265 = vmatpush1.msra.mxu0 %v217
    %266 = vmatprep.subr.mxu0 %v216
    %267 = vmatpush1.msra.mxu0 %v215
    %268 = vmatprep.subr.mxu0 %v214
    %269 = vmatpush1.msra.mxu0 %v213
    %270 = vmatprep.subr.mxu0 %v212
    %271 = vmatpush1.msra.mxu0 %v211
    %272 = vmatprep.subr.mxu0 %v210
    %273 = vmatpush1.msra.mxu0 %v209
    %274 = vmatprep.subr.mxu0 %v208
    %275 = vmatpush1.msra.mxu0 %v207
    %276 = vmatprep.subr.mxu0 %v206
    %277 = vmatpush1.msra.mxu0 %v205
    %278 = vmatprep.subr.mxu0 %v204
    %279 = vmatpush1.msra.mxu0 %v203
    %280 = vmatprep.subr.mxu0 %v202
    %281 = vmatpush1.msra.mxu0 %v201
    %282 = vmatprep.subr.mxu0 %v200
    %283 = vmatpush1.msra.mxu0 %v199
    %284 = vmatprep.subr.mxu0 %v198
    %285 = vmatpush1.msra.mxu0 %v197
    %286 = vmatprep.subr.mxu0 %v196
    %287 = vmatpush1.msra.mxu0 %v195
    %288 = vmatprep.subr.mxu0 %v194
    %289 = vmatpush1.msra.mxu0 %v193
    %290 = vmatprep.subr.mxu0 %v192
    %291 = vmatpush1.msra.mxu0 %v191
    %292 = vmatprep.subr.mxu0 %v190
    %293 = vmatpush1.msra.mxu0 %v189
    %294 = vmatprep.subr.mxu0 %v188
    %295 = vmatpush1.msra.mxu0 %v187
    %296 = vmatprep.subr.mxu0 %v250
    %297 = vmatpush2.msra.mxu0 %v249
    %298 = vmatprep.subr.mxu0 %v248
    %299 = vmatpush2.msra.mxu0 %v247
    %300 = vmatprep.subr.mxu0 %v246
    %301 = vmatpush2.msra.mxu0 %v245
    %302 = vmatprep.subr.mxu0 %v244
    %303 = vmatpush2.msra.mxu0 %v243
    %304 = vmatprep.subr.mxu0 %v242
    %305 = vmatpush2.msra.mxu0 %v241
    %306 = vmatprep.subr.mxu0 %v240
    %307 = vmatpush2.msra.mxu0 %v239
    %308 = vmatprep.subr.mxu0 %v238
    %309 = vmatpush2.msra.mxu0 %v237
    %310 = vmatprep.subr.mxu0 %v236
    %311 = vmatpush2.msra.mxu0 %v235
    %312 = vmatprep.subr.mxu0 %v234
    %313 = vmatpush2.msra.mxu0 %v233
    %314 = vmatprep.subr.mxu0 %v232
    %315 = vmatpush2.msra.mxu0 %v231
    %316 = vmatprep.subr.mxu0 %v230
    %317 = vmatpush2.msra.mxu0 %v229
    %318 = vmatprep.subr.mxu0 %v228
    %319 = vmatpush2.msra.mxu0 %v227
    %320 = vmatprep.subr.mxu0 %v226
    %321 = vmatpush2.msra.mxu0 %v225
    %322 = vmatprep.subr.mxu0 %v224
    %323 = vmatpush2.msra.mxu0 %v223
    %324 = vmatprep.subr.mxu0 %v222
    %325 = vmatpush2.msra.mxu0 %v221
    %326 = vmatprep.subr.mxu0 %v220
    %327 = vmatpush2.msra.mxu0 %v219
    %328 = vmatprep.mubr.f32.mxu0 %v186
    %329 = vmatmul.mubr.f32.gmra.mxu0 %v185
    %v330 = vpop.f32.mrf.mxu0
    %v331 = vadd.f32 %v257, %v330
    %v332 = vpop.f32.mrf.mxu0
    %v333 = vadd.f32 %v261, %v332
    %334 = vdwg.mxu0
    %vm335 = vcmp.ge.f32.partialorder %v331, 0.0
    %vm336 = vcmp.ge.f32.partialorder %v333, 0.0
    %v337 = vmul.f32 %v331, 0.01
    %v338 = vmul.f32 %v333, 0.01
    %v339 = vsel %vm335, %v331, %v337
    %v340 = vsel %vm336, %v333, %v338
    %v341 = vld [vmem:[#allocation8] sm:$0xff]
    %v342 = vld [vmem:[#allocation8 + $0x8] sm:$0xff]
    %v343 = vld [vmem:[#allocation8 + $0x10] sm:$0xff]
    %v344 = vld [vmem:[#allocation8 + $0x18] sm:$0xff]
    %v345 = vld [vmem:[#allocation8 + $0x20] sm:$0xff]
    %v346 = vld [vmem:[#allocation8 + $0x28] sm:$0xff]
    %v347 = vld [vmem:[#allocation8 + $0x30] sm:$0xff]
    %v348 = vld [vmem:[#allocation8 + $0x38] sm:$0xff]
    %v349 = vld [vmem:[#allocation8 + $0x40] sm:$0xff]
    %v350 = vld [vmem:[#allocation8 + $0x48] sm:$0xff]
    %v351 = vld [vmem:[#allocation8 + $0x50] sm:$0xff]
    %v352 = vld [vmem:[#allocation8 + $0x58] sm:$0xff]
    %v353 = vld [vmem:[#allocation8 + $0x60] sm:$0xff]
    %v354 = vld [vmem:[#allocation8 + $0x68] sm:$0xff]
    %v355 = vld [vmem:[#allocation8 + $0x70] sm:$0xff]
    %v356 = vld [vmem:[#allocation8 + $0x78] sm:$0xff]
    %v357 = vld [vmem:[#allocation8 + $0x80] sm:$0xff]
    %v358 = vld [vmem:[#allocation8 + $0x88] sm:$0xff]
    %v359 = vld [vmem:[#allocation8 + $0x90] sm:$0xff]
    %v360 = vld [vmem:[#allocation8 + $0x98] sm:$0xff]
    %v361 = vld [vmem:[#allocation8 + $0xa0] sm:$0xff]
    %v362 = vld [vmem:[#allocation8 + $0xa8] sm:$0xff]
    %v363 = vld [vmem:[#allocation8 + $0xb0] sm:$0xff]
    %v364 = vld [vmem:[#allocation8 + $0xb8] sm:$0xff]
    %v365 = vld [vmem:[#allocation8 + $0xc0] sm:$0xff]
    %v366 = vld [vmem:[#allocation8 + $0xc8] sm:$0xff]
    %v367 = vld [vmem:[#allocation8 + $0xd0] sm:$0xff]
    %v368 = vld [vmem:[#allocation8 + $0xd8] sm:$0xff]
    %v369 = vld [vmem:[#allocation8 + $0xe0] sm:$0xff]
    %v370 = vld [vmem:[#allocation8 + $0xe8] sm:$0xff]
    %v371 = vld [vmem:[#allocation8 + $0xf0] sm:$0xff]
    %v372 = vld [vmem:[#allocation8 + $0xf8] sm:$0xff]
    %v373 = vld [vmem:[#allocation10 + $0x2] sm:$0x1]
    %v374 = vlaneseq
    %v375 = vshrl.u32 %v374, 7
    %v376 = vsub.s32 0, %v375
    %v377 = vrot.slane %v373, %v376
    %378 = vmatprep.subr.mxu0 0.0
    %379 = vmatpush1.msra.mxu0 %v356
    %380 = vmatprep.subr.mxu0 0.0
    %381 = vmatpush1.msra.mxu0 %v355
    %382 = vmatprep.subr.mxu0 0.0
    %383 = vmatpush1.msra.mxu0 %v354
    %384 = vmatprep.subr.mxu0 0.0
    %385 = vmatpush1.msra.mxu0 %v353
    %386 = vmatprep.subr.mxu0 0.0
    %387 = vmatpush1.msra.mxu0 %v352
    %388 = vmatprep.subr.mxu0 0.0
    %389 = vmatpush1.msra.mxu0 %v351
    %390 = vmatprep.subr.mxu0 0.0
    %391 = vmatpush1.msra.mxu0 %v350
    %392 = vmatprep.subr.mxu0 0.0
    %393 = vmatpush1.msra.mxu0 %v349
    %394 = vmatprep.subr.mxu0 0.0
    %395 = vmatpush1.msra.mxu0 %v348
    %396 = vmatprep.subr.mxu0 0.0
    %397 = vmatpush1.msra.mxu0 %v347
    %398 = vmatprep.subr.mxu0 0.0
    %399 = vmatpush1.msra.mxu0 %v346
    %400 = vmatprep.subr.mxu0 0.0
    %401 = vmatpush1.msra.mxu0 %v345
    %402 = vmatprep.subr.mxu0 0.0
    %403 = vmatpush1.msra.mxu0 %v344
    %404 = vmatprep.subr.mxu0 0.0
    %405 = vmatpush1.msra.mxu0 %v343
    %406 = vmatprep.subr.mxu0 0.0
    %407 = vmatpush1.msra.mxu0 %v342
    %408 = vmatprep.subr.mxu0 0.0
    %409 = vmatpush1.msra.mxu0 %v341
    %410 = vmatprep.subr.mxu0 0.0
    %411 = vmatpush2.msra.mxu0 %v372
    %412 = vmatprep.subr.mxu0 0.0
    %413 = vmatpush2.msra.mxu0 %v371
    %414 = vmatprep.subr.mxu0 0.0
    %415 = vmatpush2.msra.mxu0 %v370
    %416 = vmatprep.subr.mxu0 0.0
    %417 = vmatpush2.msra.mxu0 %v369
    %418 = vmatprep.subr.mxu0 0.0
    %419 = vmatpush2.msra.mxu0 %v368
    %420 = vmatprep.subr.mxu0 0.0
    %421 = vmatpush2.msra.mxu0 %v367
    %422 = vmatprep.subr.mxu0 0.0
    %423 = vmatpush2.msra.mxu0 %v366
    %424 = vmatprep.subr.mxu0 0.0
    %425 = vmatpush2.msra.mxu0 %v365
    %426 = vmatprep.subr.mxu0 0.0
    %427 = vmatpush2.msra.mxu0 %v364
    %428 = vmatprep.subr.mxu0 0.0
    %429 = vmatpush2.msra.mxu0 %v363
    %430 = vmatprep.subr.mxu0 0.0
    %431 = vmatpush2.msra.mxu0 %v362
    %432 = vmatprep.subr.mxu0 0.0
    %433 = vmatpush2.msra.mxu0 %v361
    %434 = vmatprep.subr.mxu0 0.0
    %435 = vmatpush2.msra.mxu0 %v360
    %436 = vmatprep.subr.mxu0 0.0
    %437 = vmatpush2.msra.mxu0 %v359
    %438 = vmatprep.subr.mxu0 0.0
    %439 = vmatpush2.msra.mxu0 %v358
    %440 = vmatprep.subr.mxu0 0.0
    %441 = vmatpush2.msra.mxu0 %v357
    %442 = vmatprep.mubr.f32.mxu0 %v340
    %443 = vmatmul.mubr.f32.gmra.mxu0 %v339
    %v444 = vpop.f32.mrf.mxu0
    %v445 = vadd.f32 %v377, %v444
    %v446 = vpop.f32.mrf.mxu0
    %447 = vdwg.mxu0
    %vm448 = vcmp.ge.f32.partialorder %v445, 0.0
    %v449 = vmul.f32 %v445, 0.01
    %v450 = vsel %vm448, %v445, %v449
    %v451 = vtanh.pop %v450
    %v452 = vmul.f32 %v451, 1000000.0
    %453 = vst [vmem:[#allocation11] sm:$0xff] %v452
    // Predicated region
    $region42: #{tpu_custom_call.1} parent=1 // pred_check
      _
    $region43: #{tpu_custom_call.1} parent=1 // pred_check_branch
      %455 = sbr.rel (0) target = $region45
    $region44: #{tpu_custom_call.1} parent=1 // pred_region
      %s457 = ssub.s32 128, 128
      %458 = vsyncadd [#allocation4], %s457
      %s460 = sshll.u32 [#allocation11], 4
      %s461 = int_to_ptr.vmem [resolvable:$true] %s460
      %463 = dma.vmem_to_hbm [thread:$0]  %s461, 128, %s5, [#allocation4]
    $region45: #{tpu_custom_call.1} parent=1 // pred_fallthru
      _
    // Predicated region
    $region46: #{tpu_custom_call.1} parent=1 // pred_check
      _
    $region47: #{tpu_custom_call.1} parent=1 // pred_check_branch
      %465 = sbr.rel (0) target = $region49
    $region48: #{tpu_custom_call.1} parent=1 // pred_region
      %466 = dma.done [#allocation4], 128
    $region49: #{tpu_custom_call.1} parent=1 // pred_fallthru
      _
    %467 = vsyncpa [#allocation3], 1
    %468 = vsyncpa [#allocation6], 1
    %469 = vsyncpa [#allocation9], 1
    %470 = vsyncpa [#allocation4], 1

</llo_original>
